<compile_context>
chip_gen: v6e
topology: v6e:2x2x1
jax: 0.10.0
libtpu: 0.0.40
codegen_flags: <defaults>
</compile_context>

<pallas_src>
import jax
import jax.numpy as jnp
from jax.experimental import pallas as pl
from jax.experimental.pallas import tpu as pltpu


def _tanh_inverse_kernel(x_ref, o_ref):
    x = x_ref[...].astype(jnp.float32)
    x = jnp.clip(x, -0.999, 0.999)
    # atanh(x) = 0.5 * (log1p(x) - log1p(-x)); divide-free, EUP-resident.
    y = 0.5 * (jnp.log1p(x) - jnp.log1p(-x))
    o_ref[...] = y.astype(o_ref.dtype)


def _device_params():
    """Generation-aware (target_block_bytes, vmem_limit_bytes, want_multi_block)."""
    try:
        kind = jax.devices()[0].device_kind.lower()
    except Exception:
        kind = ""
    if "v7" in kind:
        # v7x: 64 MiB VMEM per TC, 2 TCs share HBM -> smaller blocks, >=2 blocks.
        return 4 * 1024 * 1024, 48 * 1024 * 1024, True
    # v5e / v6e: 128 MiB physical VMEM, single TC -> go big.
    return 8 * 1024 * 1024, 64 * 1024 * 1024, False


def _choose_tiling(n, itemsize, target_block_bytes, want_multi_block):
    """Pick (lanes, rows, tile_rows) for a lane-dense 2D slab; n % 128 == 0."""
    align = 8 if itemsize >= 4 else (16 if itemsize == 2 else 32)
    divisors = [c for c in (2048, 1024, 512, 256, 128) if n % c == 0]

    # Widest lane count that keeps full sublane packing (rows % align == 0),
    # otherwise widest with rows >= align, otherwise just the widest divisor.
    lanes = None
    for c in divisors:
        r = n // c
        if r >= align and r % align == 0:
            lanes = c
            break
    if lanes is None:
        for c in divisors:
            if (n // c) >= align:
                lanes = c
                break
    if lanes is None:
        lanes = divisors[0]
    rows = n // lanes

    row_bytes = lanes * itemsize
    tile_rows = max(1, target_block_bytes // row_bytes)
    if tile_rows >= rows:
        tile_rows = rows  # block equals full dim -> always legal
    else:
        tile_rows = max(align, (tile_rows // align) * align)

    # v7x: make sure the parallel grid axis has >= 2 blocks so both
    # TensorCores get work (single-block grids leave half the chip idle).
    if want_multi_block and rows >= 2 * align:
        half = (rows // 2 // align) * align
        if half >= align:
            tile_rows = min(tile_rows, half)
    return lanes, rows, tile_rows


def _atanh_flat(x_flat, n, itemsize, dtype):
    """Run the Pallas kernel on a flat, 128-divisible chunk; returns flat result."""
    target_block_bytes, vmem_limit, want_multi_block = _device_params()
    lanes, rows, tile_rows = _choose_tiling(
        n, itemsize, target_block_bytes, want_multi_block)
    x2d = x_flat.reshape(rows, lanes)

    out2d = pl.pallas_call(
        _tanh_inverse_kernel,
        out_shape=jax.ShapeDtypeStruct((rows, lanes), dtype),
        grid=(pl.cdiv(rows, tile_rows),),
        in_specs=[pl.BlockSpec((tile_rows, lanes), lambda i: (i, 0))],
        out_specs=pl.BlockSpec((tile_rows, lanes), lambda i: (i, 0)),
        compiler_params=pltpu.CompilerParams(
            dimension_semantics=("parallel",),
            vmem_limit_bytes=vmem_limit,
        ),
        cost_estimate=pl.CostEstimate(
            flops=6 * n,
            transcendentals=2 * n,
            bytes_accessed=2 * n * itemsize,
        ),
    )(x2d)
    return out2d.reshape(-1)


def tanh_inverse(x):
    """Elementwise atanh(clamp(x, -0.999, 0.999)), matching the PyTorch module."""
    orig_shape = x.shape
    orig_dtype = x.dtype
    n = x.size
    itemsize = jnp.dtype(orig_dtype).itemsize

    if n == 0:
        return x

    if n % 128 == 0:
        out_flat = _atanh_flat(jnp.ravel(x), n, itemsize, orig_dtype)
        return out_flat.reshape(orig_shape)

    # Ragged total size: kernel on the 128-aligned prefix, tiny (<128 elem)
    # tail in plain jnp -- avoids pad-copy and trailing slice HBM passes.
    x_flat = jnp.ravel(x)
    n_main = (n // 128) * 128
    tail = x_flat[n_main:]
    tail_out = jnp.arctanh(jnp.clip(tail, -0.999, 0.999)).astype(orig_dtype)
    if n_main == 0:
        return tail_out.reshape(orig_shape)
    main_out = _atanh_flat(x_flat[:n_main], n_main, itemsize, orig_dtype)
    return jnp.concatenate([main_out, tail_out]).reshape(orig_shape)


if __name__ == "__main__":
    key = jax.random.PRNGKey(0)
    # Small NCHW input consistent with an activation-layer usage.
    x = jax.random.uniform(key, (2, 4, 16, 16), dtype=jnp.float32,
                           minval=-1.5, maxval=1.5)

    y = tanh_inverse(x)
    jax.block_until_ready(y)

    # Reference check in plain JAX.
    y_ref = jnp.arctanh(jnp.clip(x, -0.999, 0.999))
    assert y.shape == x.shape and y.dtype == x.dtype
    assert jnp.allclose(y, y_ref, atol=1e-5, rtol=1e-5)

    print("KERNEL_OK")
</pallas_src>

<mosaic_0001>
module attributes {stable_mosaic.version = 11 : i64} {
  func.func @_tanh_inverse_kernel(%arg0: i32, %arg1: memref<8x256xf32, #tpu.memory_space<vmem>>, %arg2: memref<8x256xf32, #tpu.memory_space<vmem>>) attributes {dimension_semantics = [#tpu.dimension_semantics<parallel>], iteration_bounds = array<i64: 1>, scalar_prefetch = 0 : i64, scratch_operands = 0 : i64, tpu.core_type = #tpu.core_type<tc>, window_params = [{transform_indices = @transform_0, window_bounds = array<i64: 8, 256>}, {transform_indices = @transform_1, window_bounds = array<i64: 8, 256>}]} {
    %c0 = arith.constant 0 : index
    %c0_0 = arith.constant 0 : index
    %0 = vector.load %arg1[%c0, %c0_0] : memref<8x256xf32, #tpu.memory_space<vmem>>, vector<8x256xf32>
    %cst = arith.constant -9.990000e-01 : f32
    %cst_1 = arith.constant 9.990000e-01 : f32
    %1 = vector.broadcast %cst : f32 to vector<8x256xf32>
    %2 = arith.maximumf %1, %0 : vector<8x256xf32>
    %3 = vector.broadcast %cst_1 : f32 to vector<8x256xf32>
    %4 = arith.minimumf %3, %2 : vector<8x256xf32>
    %5 = math.log1p %4 : vector<8x256xf32>
    %cst_2 = arith.constant 0.000000e+00 : f32
    %6 = vector.broadcast %cst_2 : f32 to vector<8x256xf32>
    %7 = arith.subf %6, %4 : vector<8x256xf32>
    %8 = math.log1p %7 : vector<8x256xf32>
    %9 = arith.subf %5, %8 : vector<8x256xf32>
    %cst_3 = arith.constant 5.000000e-01 : f32
    %10 = vector.broadcast %cst_3 : f32 to vector<8x256xf32>
    %11 = arith.mulf %10, %9 : vector<8x256xf32>
    %c0_4 = arith.constant 0 : index
    %c0_5 = arith.constant 0 : index
    %12 = vector.load %arg2[%c0_4, %c0_5] : memref<8x256xf32, #tpu.memory_space<vmem>>, vector<8x256xf32>
    tpu.vector_store %arg2[%c0_4, %c0_5], %11 {strides = array<i32>} : memref<8x256xf32, #tpu.memory_space<vmem>>, vector<8x256xf32>,
    return
  }
  func.func @transform_0(%arg0: i32) -> (i32, i32) {
    %c0_i32 = arith.constant 0 : i32
    %c0_i32_0 = arith.constant 0 : i32
    return %arg0, %c0_i32 : i32, i32
  }
  func.func @transform_1(%arg0: i32) -> (i32, i32) {
    %c0_i32 = arith.constant 0 : i32
    %c0_i32_0 = arith.constant 0 : i32
    return %arg0, %c0_i32 : i32, i32
  }
}

</mosaic_0001>

<llo_original>
// kernel: tpu_custom_call.1
$region0: #{tpu_custom_call.1}
  #allocation0 [shape = 'u32[]', space=smem, size = 0x4, offset = 0x4, fixed_abs, tag = 'smem constant byte address 0x4 - core index']
  #allocation1 [shape = 'u32[144,128]{1,0:T(1,128)}', space=vmem, size = 0x12000, scoped, tag = 'internal scratch']
  %s0 = inlined_call_operand.hbm [shape: f32[8,256], index: 0, kind: input, shape index: {}]
  %s1 = inlined_call_operand.hbm [shape: f32[8,256], index: 1, kind: output, shape index: {}]
  %s2 = sld [smem:[#allocation0]]
  $region18: #{tpu_custom_call.1} parent=0
    _
  %s4 = ssub.s32 1, %s2
  %s5 = scalar_select 0, %s4, %s2
  $region1: #{tpu_custom_call.1} parent=0
    #allocation2 [shape = 'u8[8192]{0}', space=vmem, size = 0x2000, scoped, tag = 'input window, operand 0, single buffered']
    #allocation3 [shape = 's32[1]{0}', space=sflag, size = 0x4, scoped, tag = 'scoped memory for tpu_custom_call.1']
    #allocation4 [shape = 's32[1]{0}', space=sflag, size = 0x4, scoped, tag = 'scoped memory for tpu_custom_call.1']
    #allocation5 [shape = 'u8[8192]{0}', space=vmem, size = 0x2000, scoped, tag = 'output window, operand 0, single buffered']
    %6 = vsyncpa [#allocation3], 0
    %7 = vsyncpa [#allocation4], 0
    // Predicated region
    $region2: #{tpu_custom_call.1} parent=1 // pred_check
      _
    $region3: #{tpu_custom_call.1} parent=1 // pred_check_branch
      %9 = sbr.rel (0) target = $region5
    $region4: #{tpu_custom_call.1} parent=1 // pred_region
      %s11 = ssub.s32 256, 256
      %12 = vsyncadd [#allocation3], %s11
      %s14 = sshll.u32 [#allocation2], 4
      %s15 = int_to_ptr.vmem [resolvable:$true] %s14
      %17 = dma.hbm_to_vmem [thread:$0]  %s0, 256, %s15, [#allocation3]
    $region5: #{tpu_custom_call.1} parent=1 // pred_fallthru
      _
    // Predicated region
    $region6: #{tpu_custom_call.1} parent=1 // pred_check
      _
    $region7: #{tpu_custom_call.1} parent=1 // pred_check_branch
      %19 = sbr.rel (0) target = $region9
    $region8: #{tpu_custom_call.1} parent=1 // pred_region
      %20 = dma.done [#allocation3], 256
    $region9: #{tpu_custom_call.1} parent=1 // pred_fallthru
      _
    %v21 = vld [vmem:[#allocation2] sm:$0xff]
    %v22 = vld [vmem:[#allocation2 + $0x8] sm:$0xff]
    %v23 = vmax.f32 %v21, -0.999
    %v24 = vmax.f32 %v22, -0.999
    %v25 = vmin.f32 %v23, 0.999
    %v26 = vmin.f32 %v24, 0.999
    %v27 = vadd.f32 %v25, 1.0
    %v28 = vlog2.pop %v27
    %v29 = vmul.f32 %v28, 0.6931472
    %v30 = vmul.f32 -0.5, %v25
    %v31 = vadd.f32 %v30, 1.0
    %v32 = vmul.f32 %v31, %v25
    %v33 = vand.u32 2147483647, %v25
    %vm34 = vcmp.lt.f32.partialorder %v33, 0.0004427343
    %v35 = vsel %vm34, %v32, %v29
    %v36 = vadd.f32 %v26, 1.0
    %v37 = vlog2.pop %v36
    %v38 = vmul.f32 %v37, 0.6931472
    %v39 = vmul.f32 -0.5, %v26
    %v40 = vadd.f32 %v39, 1.0
    %v41 = vmul.f32 %v40, %v26
    %v42 = vand.u32 2147483647, %v26
    %vm43 = vcmp.lt.f32.partialorder %v42, 0.0004427343
    %v44 = vsel %vm43, %v41, %v38
    %v45 = vsub.f32 0.0, %v25
    %v46 = vsub.f32 0.0, %v26
    %v47 = vadd.f32 %v45, 1.0
    %v48 = vlog2.pop %v47
    %v49 = vmul.f32 %v48, 0.6931472
    %v50 = vmul.f32 -0.5, %v45
    %v51 = vadd.f32 %v50, 1.0
    %v52 = vmul.f32 %v51, %v45
    %v53 = vand.u32 2147483647, %v45
    %vm54 = vcmp.lt.f32.partialorder %v53, 0.0004427343
    %v55 = vsel %vm54, %v52, %v49
    %v56 = vadd.f32 %v46, 1.0
    %v57 = vlog2.pop %v56
    %v58 = vmul.f32 %v57, 0.6931472
    %v59 = vmul.f32 -0.5, %v46
    %v60 = vadd.f32 %v59, 1.0
    %v61 = vmul.f32 %v60, %v46
    %v62 = vand.u32 2147483647, %v46
    %vm63 = vcmp.lt.f32.partialorder %v62, 0.0004427343
    %v64 = vsel %vm63, %v61, %v58
    %v65 = vsub.f32 %v35, %v55
    %v66 = vsub.f32 %v44, %v64
    %v67 = vmul.f32 %v65, 0.5
    %v68 = vmul.f32 %v66, 0.5
    %69 = vst [vmem:[#allocation5] sm:$0xff] %v67
    %70 = vst [vmem:[#allocation5 + $0x8] sm:$0xff] %v68
    // Predicated region
    $region10: #{tpu_custom_call.1} parent=1 // pred_check
      _
    $region11: #{tpu_custom_call.1} parent=1 // pred_check_branch
      %72 = sbr.rel (0) target = $region13
    $region12: #{tpu_custom_call.1} parent=1 // pred_region
      %s74 = ssub.s32 256, 256
      %75 = vsyncadd [#allocation4], %s74
      %s77 = sshll.u32 [#allocation5], 4
      %s78 = int_to_ptr.vmem [resolvable:$true] %s77
      %80 = dma.vmem_to_hbm [thread:$0]  %s78, 256, %s1, [#allocation4]
    $region13: #{tpu_custom_call.1} parent=1 // pred_fallthru
      _
    // Predicated region
    $region14: #{tpu_custom_call.1} parent=1 // pred_check
      _
    $region15: #{tpu_custom_call.1} parent=1 // pred_check_branch
      %82 = sbr.rel (0) target = $region17
    $region16: #{tpu_custom_call.1} parent=1 // pred_region
      %83 = dma.done [#allocation4], 256
    $region17: #{tpu_custom_call.1} parent=1 // pred_fallthru
      _
    %84 = vsyncpa [#allocation3], 1
    %85 = vsyncpa [#allocation4], 1

</llo_original>
